<compile_context>
chip_gen: v7x
topology: tpu7x:2x2x1
jax: 0.10.0
libtpu: 0.0.40
codegen_flags: <defaults>
</compile_context>

<pallas_src>
import functools

import jax
import jax.numpy as jnp
from jax.experimental import pallas as pl
from jax.experimental.pallas import tpu as pltpu

_LANE = 128


def _round_up(x: int, m: int) -> int:
    return -(-x // m) * m


def _int_exponent(p: float):
    """Small integer exponent -> cheap VPU multiply chain; else None."""
    return int(p) if (float(p).is_integer() and 1.0 <= p <= 8.0) else None


def _vmem_limit_bytes() -> int:
    """Generation-aware scoped-VMEM limit (v7x: 64 MiB/TC, v5e/v6e: 128 MiB)."""
    try:
        cap = pltpu.get_tpu_info().vmem_capacity_bytes
    except Exception:  # conservative fallback (covers v7x's 64 MiB per TC)
        cap = 64 << 20
    return max(32 << 20, min(64 << 20, cap // 2))


def _plan_tiling(nc: int, hw: int, elem_bytes: int):
    """Pick (tm, tk, num_k, vmem_limit) for a (nc, hw) row-wise reduction."""
    sub = {4: 8, 2: 16, 1: 32}.get(elem_bytes, 8)   # sublane packing multiple
    hw_pad = _round_up(hw, _LANE)                    # lane padding inside VMEM

    vmem_limit = _vmem_limit_bytes()
    usable = (vmem_limit * 3) // 4                   # headroom for Mosaic scratch
    per_buf = usable // 2                            # double-buffered input

    # --- HW chunking (large-HW safety path): keep >= MIN_ROWS rows per tile.
    MIN_ROWS = 512
    rows_target = max(sub, min(MIN_ROWS, nc))
    if rows_target * hw_pad * elem_bytes <= per_buf:
        tk, tk_pad, num_k = hw, hw_pad, 1            # single chunk = full HW
    else:
        tk_pad = max(_LANE, (per_buf // (MIN_ROWS * elem_bytes)) // _LANE * _LANE)
        tk, num_k = tk_pad, pl.cdiv(hw, tk_pad)

    # --- Row tile from the VMEM budget (input lane padding + small out/acc).
    per_row = tk_pad * elem_bytes + 128
    tm = per_buf // per_row
    # Each step should move >= ~2 MiB of real HBM bytes, but keep ~8+ steps so
    # the pipeline overlaps and (on v7x) both TensorCores get work.
    tm_2mb = -(-(2 << 20) // (min(tk, hw) * elem_bytes))
    tm_8steps = -(-nc // 8)
    tm = min(tm, max(tm_2mb, tm_8steps))

    g = 256 if nc >= 256 else sub                    # keep tm lane+sublane aligned
    nc_pad = _round_up(nc, g)
    tm = max(g, min(tm, nc_pad))
    tm = (tm // g) * g
    return tm, tk, num_k, vmem_limit


def _make_gem_kernel(p: float, eps: float, hw: int, tk: int, needs_mask: bool):
    inv_p = 1.0 / p
    inv_hw = 1.0 / hw
    p_int = _int_exponent(p)

    def gem_kernel(x_ref, o_ref, acc_ref):
        # x_ref: (TM, TK) input chunk; o_ref: (1, 1, TM) lane-dense output row;
        # acc_ref: (1, TM) f32 running sum over HW chunks.
        k = pl.program_id(1)

        @pl.when(k == 0)
        def _init():
            acc_ref[...] = jnp.zeros_like(acc_ref)

        x = jnp.maximum(x_ref[...].astype(jnp.float32), eps)    # clamp(min=eps)
        if p_int is not None:
            xp = x
            for _ in range(p_int - 1):                           # p=3 -> x*x*x (VPU)
                xp = xp * x
        else:
            xp = x ** p                                          # generic pow (EUP)

        if needs_mask:
            # Last HW chunk is partial: zero the out-of-range columns so they
            # do not pollute the per-row sums.
            col = k * tk + jax.lax.broadcasted_iota(jnp.int32, xp.shape, 1)
            xp = jnp.where(col < hw, xp, 0.0)

        part = jnp.sum(xp, axis=-1, keepdims=True)               # (TM, 1)
        # Relayout the per-row sums to a lane-dense (1, TM) row; this keeps the
        # output block, its double-buffer and the HBM writeback lane-dense.
        acc_ref[...] += part.reshape(acc_ref.shape)

        @pl.when(k == pl.num_programs(1) - 1)
        def _finalize():
            m = acc_ref[...] * inv_hw                            # mean over H*W
            o_ref[...] = (m ** inv_p).reshape(o_ref.shape).astype(o_ref.dtype)

    return gem_kernel


@functools.partial(jax.jit, static_argnames=("p", "eps"))
def gem_pallas(x, p: float = 3.0, eps: float = 1e-6):
    """GeM pooling. x: (N, C, H, W) -> (N, C, 1, 1), same dtype as x."""
    N, C, H, W = x.shape
    NC, HW = N * C, H * W
    x2d = x.reshape(NC, HW)

    elem_bytes = x.dtype.itemsize
    tm, tk, num_k, vmem_limit = _plan_tiling(NC, HW, elem_bytes)
    grid_rows = pl.cdiv(NC, tm)
    needs_mask = (num_k > 1) and (HW % tk != 0)

    kernel = _make_gem_kernel(float(p), float(eps), HW, tk, needs_mask)

    p_int = _int_exponent(float(p))
    flops = (p_int + 2 if p_int is not None else 3) * NC * HW
    transcendentals = (0 if p_int is not None else 2 * NC * HW) + 2 * NC
    cost = pl.CostEstimate(
        flops=flops,
        transcendentals=transcendentals,
        bytes_accessed=NC * HW * elem_bytes + NC * elem_bytes,
    )

    out = pl.pallas_call(
        kernel,
        out_shape=jax.ShapeDtypeStruct((grid_rows, 1, tm), x.dtype),
        grid_spec=pltpu.PrefetchScalarGridSpec(
            num_scalar_prefetch=0,
            grid=(grid_rows, num_k),
            in_specs=[pl.BlockSpec((tm, tk), lambda i, k: (i, k))],
            out_specs=pl.BlockSpec((1, 1, tm), lambda i, k: (i, 0, 0)),
            scratch_shapes=[pltpu.VMEM((1, tm), jnp.float32)],
        ),
        compiler_params=pltpu.CompilerParams(
            # Rows are independent -> parallel (sharded across TCs on v7x);
            # HW chunks accumulate into scratch -> arbitrary (innermost axis).
            dimension_semantics=("parallel", "arbitrary"),
            vmem_limit_bytes=vmem_limit,
        ),
        cost_estimate=cost,
    )(x2d)

    # (grid_rows, 1, tm) lane-dense slab -> first NC values (tail is padding).
    pooled = out.reshape(-1)[:NC]
    return pooled.reshape(N, C, 1, 1)


class GeM:
    """JAX/Pallas port of the PyTorch GeM module (p_trainable=False)."""

    def __init__(self, p=3, eps=1e-6, p_trainable=False):
        # TODO(synk): p_trainable=True (traced/learnable p) would need p as a
        # runtime scalar; here p is a static Python scalar (default module use).
        self.p = float(p)
        self.eps = float(eps)

    def __call__(self, x):
        return gem_pallas(x, p=self.p, eps=self.eps)


if __name__ == "__main__":
    key = jax.random.PRNGKey(0)
    N, C, H, W = 2, 4, 16, 16
    x = jax.random.uniform(key, (N, C, H, W), dtype=jnp.float32)

    module = GeM(p=3, eps=1e-6)
    out = module(x)
    out = jax.block_until_ready(out)

    # Sanity check against a pure-JAX reference of the PyTorch semantics.
    ref = jnp.mean(jnp.maximum(x, 1e-6) ** 3.0, axis=(-2, -1), keepdims=True) ** (1.0 / 3.0)
    assert out.shape == (N, C, 1, 1), out.shape
    assert jnp.allclose(out, ref, atol=1e-5, rtol=1e-5), "mismatch vs reference"

    print("KERNEL_OK")
</pallas_src>

<mosaic_0001>
module attributes {stable_mosaic.version = 11 : i64} {
  func.func @gem_kernel(%arg0: i32, %arg1: i32, %arg2: memref<8x256xf32, #tpu.memory_space<vmem>>, %arg3: memref<1x1x8xf32, #tpu.memory_space<vmem>>, %arg4: memref<1x8xf32, #tpu.memory_space<vmem>>) attributes {dimension_semantics = [#tpu.dimension_semantics<parallel>, #tpu.dimension_semantics<arbitrary>], iteration_bounds = array<i64: 1, 1>, scalar_prefetch = 0 : i64, scratch_operands = 1 : i64, tpu.core_type = #tpu.core_type<tc>, window_params = [{transform_indices = @transform_0, window_bounds = array<i64: 8, 256>}, {transform_indices = @transform_1, window_bounds = array<i64: 1, 1, 8>}]} {
    %c0_i32 = arith.constant 0 : i32
    %0 = arith.cmpi eq, %arg1, %c0_i32 : i32
    %1 = arith.extui %0 : i1 to i32
    %c0_i32_0 = arith.constant 0 : i32
    %2 = arith.cmpi ne, %1, %c0_i32_0 : i32
    scf.if %2 {
      %cst_9 = arith.constant 0.000000e+00 : f32
      %17 = vector.broadcast %cst_9 : f32 to vector<1x8xf32>
      %c0_10 = arith.constant 0 : index
      %c0_11 = arith.constant 0 : index
      %18 = vector.load %arg4[%c0_10, %c0_11] : memref<1x8xf32, #tpu.memory_space<vmem>>, vector<1x8xf32>
      tpu.vector_store %arg4[%c0_10, %c0_11], %17 {strides = array<i32>} : memref<1x8xf32, #tpu.memory_space<vmem>>, vector<1x8xf32>,
    } else {
    }
    %c0 = arith.constant 0 : index
    %c0_1 = arith.constant 0 : index
    %3 = vector.load %arg2[%c0, %c0_1] : memref<8x256xf32, #tpu.memory_space<vmem>>, vector<8x256xf32>
    %cst = arith.constant 9.99999997E-7 : f32
    %4 = vector.broadcast %cst : f32 to vector<8x256xf32>
    %5 = arith.maximumf %3, %4 : vector<8x256xf32>
    %6 = arith.mulf %5, %5 : vector<8x256xf32>
    %7 = arith.mulf %6, %5 : vector<8x256xf32>
    %cst_2 = arith.constant dense<0.000000e+00> : vector<8xf32>
    %8 = vector.multi_reduction <add>, %7, %cst_2 [1] : vector<8x256xf32> to vector<8xf32>
    %9 = vector.shape_cast %8 : vector<8xf32> to vector<8x1xf32>
    %c0_3 = arith.constant 0 : index
    %c0_4 = arith.constant 0 : index
    %10 = vector.load %arg4[%c0_3, %c0_4] : memref<1x8xf32, #tpu.memory_space<vmem>>, vector<1x8xf32>
    %11 = vector.shape_cast %9 : vector<8x1xf32> to vector<1x8xf32>
    %12 = arith.addf %10, %11 : vector<1x8xf32>
    %c0_5 = arith.constant 0 : index
    %c0_6 = arith.constant 0 : index
    %13 = vector.load %arg4[%c0_5, %c0_6] : memref<1x8xf32, #tpu.memory_space<vmem>>, vector<1x8xf32>
    tpu.vector_store %arg4[%c0_5, %c0_6], %12 {strides = array<i32>} : memref<1x8xf32, #tpu.memory_space<vmem>>, vector<1x8xf32>,
    %c0_i32_7 = arith.constant 0 : i32
    %14 = arith.cmpi eq, %arg1, %c0_i32_7 : i32
    %15 = arith.extui %14 : i1 to i32
    %c0_i32_8 = arith.constant 0 : i32
    %16 = arith.cmpi ne, %15, %c0_i32_8 : i32
    scf.if %16 {
      %c0_9 = arith.constant 0 : index
      %c0_10 = arith.constant 0 : index
      %17 = vector.load %arg4[%c0_9, %c0_10] : memref<1x8xf32, #tpu.memory_space<vmem>>, vector<1x8xf32>
      %cst_11 = arith.constant 3.906250e-03 : f32
      %18 = vector.broadcast %cst_11 : f32 to vector<1x8xf32>
      %19 = arith.mulf %17, %18 : vector<1x8xf32>
      %cst_12 = arith.constant 0.333333343 : f32
      %20 = vector.broadcast %cst_12 : f32 to vector<1x8xf32>
      %21 = math.powf %19, %20 : vector<1x8xf32>
      %22 = vector.shape_cast %21 : vector<1x8xf32> to vector<1x1x8xf32>
      %c0_13 = arith.constant 0 : index
      %c0_14 = arith.constant 0 : index
      %c0_15 = arith.constant 0 : index
      %23 = vector.load %arg3[%c0_13, %c0_14, %c0_15] : memref<1x1x8xf32, #tpu.memory_space<vmem>>, vector<1x1x8xf32>
      tpu.vector_store %arg3[%c0_13, %c0_14, %c0_15], %22 {strides = array<i32>} : memref<1x1x8xf32, #tpu.memory_space<vmem>>, vector<1x1x8xf32>,
    } else {
    }
    return
  }
  func.func @transform_0(%arg0: i32, %arg1: i32) -> (i32, i32) {
    %c0_i32 = arith.constant 0 : i32
    return %arg0, %arg1 : i32, i32
  }
  func.func @transform_1(%arg0: i32, %arg1: i32) -> (i32, i32, i32) {
    %c0_i32 = arith.constant 0 : i32
    %c0_i32_0 = arith.constant 0 : i32
    %c0_i32_1 = arith.constant 0 : i32
    return %arg0, %c0_i32, %c0_i32_0 : i32, i32, i32
  }
}

</mosaic_0001>

<llo_original>
// kernel: gem_pallas.1
$region0: #{gem_pallas.1}
  #allocation0 [shape = 'u32[]', space=smem, size = 0x4, offset = 0x4, fixed_abs, tag = 'smem constant byte address 0x4 - core index']
  #allocation1 [shape = 'u32[144,128]{1,0:T(1,128)}', space=vmem, size = 0x12000, scoped, tag = 'internal scratch']
  #allocation2 [shape = 'f32[1,8]{1,0:T(1,128)}', space=vmem, size = 0x200, scoped, tag = 'scratch operand']
  %s0 = inlined_call_operand.vmem [shape: f32[8,256], index: 0, kind: input, shape index: {}]
  %s1 = inlined_call_operand.vmem [shape: f32[1,1,8], index: 1, kind: output, shape index: {}]
  %s2 = sld [smem:[#allocation0]]
  $region22: #{gem_pallas.1} parent=0
    _
  %s4 = ssub.s32 1, %s2
  %s5 = scalar_select 0, %s4, %s2
  // Predicated region
  $region2: #{gem_pallas.1} parent=0 // pred_check
    _
  $region3: #{gem_pallas.1} parent=0 // pred_check_branch
    %7 = sbr.rel (0) target = $region5
  $region4: #{gem_pallas.1} parent=0 // pred_region
    _
  $region5: #{gem_pallas.1} parent=0 // pred_fallthru
    _
  %p8 = scmp.eq.s32.totalorder 0, 0
  // Predicated region
  $region6: #{gem_pallas.1} parent=0 // pred_check
    %p9 = pneg %p8
  $region7: #{gem_pallas.1} parent=0 // pred_check_branch
    %11 = sbr.rel (%p9) target = $region9
  $region8: #{gem_pallas.1} parent=0 // pred_region
    %vm12 = vcmask 57344
    %13 = vst.msk [vmem:[#allocation2] sm:$0x1] %vm12, 0.0
  $region9: #{gem_pallas.1} parent=0 // pred_fallthru
    _
  %v14 = vld [vmem:[%s0] sm:$0xff]
  %v15 = vld [vmem:[%s0 + $0x8] sm:$0xff]
  %v16 = vmax.f32 %v14, 1e-06
  %v17 = vmax.f32 %v15, 1e-06
  %v18 = vmul.f32 %v16, %v16
  %v19 = vmul.f32 %v17, %v17
  %v20 = vmul.f32 %v18, %v16
  %v21 = vmul.f32 %v19, %v17
  %v22 = vadd.f32 %v20, %v21
  %23 = vadd.xlane.f32.xlu0 %v22
  %v24 = vpop.xlane.xlu0 %23
  %v25 = vld [vmem:[#allocation2] sm:$0x1]
  %v27 = vlaneseq
  %v28 = vshrl.u32 %v27, 7
  %v29 = vsub.s32 0, %v28
  %v30 = vrot.slane %v24, %v29
  %v31 = vlaneseq
  %v32 = vshrl.u32 %v31, 7
  %v33 = vsub.s32 1, %v32
  %v34 = vrot.slane %v24, %v33
  %v35 = vlaneseq
  %v36 = vshrl.u32 %v35, 7
  %v37 = vsub.s32 2, %v36
  %v38 = vrot.slane %v24, %v37
  %v39 = vlaneseq
  %v40 = vshrl.u32 %v39, 7
  %v41 = vsub.s32 3, %v40
  %v42 = vrot.slane %v24, %v41
  %v43 = vlaneseq
  %v44 = vshrl.u32 %v43, 7
  %v45 = vsub.s32 4, %v44
  %v46 = vrot.slane %v24, %v45
  %v47 = vlaneseq
  %v48 = vshrl.u32 %v47, 7
  %v49 = vsub.s32 5, %v48
  %v50 = vrot.slane %v24, %v49
  %v51 = vlaneseq
  %v52 = vshrl.u32 %v51, 7
  %v53 = vsub.s32 6, %v52
  %v54 = vrot.slane %v24, %v53
  %v55 = vlaneseq
  %v56 = vshrl.u32 %v55, 7
  %v57 = vsub.s32 7, %v56
  %v58 = vrot.slane %v24, %v57
  %v59 = vcombine.low %v30, %v34
  %v60 = vcombine.low %v38, %v42
  %v61 = vcombine.low %v46, %v50
  %v62 = vcombine.low %v54, %v58
  %v64 = vunpack.c.l.s4 1966171168
  %v65 = vunpack.c.0.s8 %v64
  %v66 = vlaneseq
  %v67 = vshrl.u32 %v66, 7
  %v68 = vsub.s32 %v65, %v67
  %v69 = vrot.slane %v59, %v68
  %v71 = vunpack.c.l.s4 1966171168
  %v72 = vunpack.c.0.s8 %v71
  %v73 = vlaneseq
  %v74 = vshrl.u32 %v73, 7
  %v75 = vsub.s32 %v72, %v74
  %v76 = vrot.slane %v60, %v75
  %v78 = vunpack.c.l.s4 1966171168
  %v79 = vunpack.c.0.s8 %v78
  %v80 = vlaneseq
  %v81 = vshrl.u32 %v80, 7
  %v82 = vsub.s32 %v79, %v81
  %v83 = vrot.slane %v61, %v82
  %v85 = vunpack.c.l.s4 1966171168
  %v86 = vunpack.c.0.s8 %v85
  %v87 = vlaneseq
  %v88 = vshrl.u32 %v87, 7
  %v89 = vsub.s32 %v86, %v88
  %v90 = vrot.slane %v62, %v89
  %v91 = vcombine.low %v69, %v76
  %v92 = vcombine.low %v83, %v90
  %v94 = vunpack.c.l.s4 1966171168
  %v95 = vunpack.c.0.s8 %v94
  %v96 = vlaneseq
  %v97 = vshrl.u32 %v96, 7
  %v98 = vsub.s32 %v95, %v97
  %v99 = vrot.slane %v91, %v98
  %v101 = vunpack.c.l.s4 1966171168
  %v102 = vunpack.c.0.s8 %v101
  %v103 = vlaneseq
  %v104 = vshrl.u32 %v103, 7
  %v105 = vsub.s32 %v102, %v104
  %v106 = vrot.slane %v92, %v105
  %v107 = vcombine.low %v99, %v106
  %108 = vset.pattern.permute.xlu0 0
  %109 = vperm.xlu0 %108, %v107
  %v110 = vpop.permute.xlu0 %109
  %v111 = vlaneseq
  %v112 = vand.u32 %v111, 127
  %v113 = vlaneseq
  %v114 = vshrl.u32 %v113, 7
  %v115 = vsub.s32 %v112, %v114
  %v116 = vrot.slane %v110, %v115
  %v118 = vunpack.c.l.s4 1966171168
  %v119 = vunpack.c.0.s8 %v118
  %v120 = vlaneseq
  %v121 = vshrl.u32 %v120, 7
  %v122 = vsub.s32 %v119, %v121
  %v123 = vrot.slane %v116, %v122
  %v125 = vunpack.c.l.s4 1966171168
  %v126 = vunpack.c.0.s8 %v125
  %v127 = vlaneseq
  %v128 = vshrl.u32 %v127, 7
  %v129 = vsub.s32 %v126, %v128
  %v130 = vrot.slane %v123, %v129
  %v132 = vadd.f32 %v25, %v130
  %vm133 = vcmask 57344
  %134 = vst.msk [vmem:[#allocation2] sm:$0x1] %vm133, %v132
  // Predicated region
  $region10: #{gem_pallas.1} parent=0 // pred_check
    %p135 = pneg %p8
  $region11: #{gem_pallas.1} parent=0 // pred_check_branch
    %137 = sbr.rel (%p135) target = $region13
  $region12: #{gem_pallas.1} parent=0 // pred_region
    %v138 = vld [vmem:[#allocation2] sm:$0x1]
    %v139 = vmul.f32 %v138, 0.00390625
    %v140 = vpow.f32 %v139, 0.33333334
    %141 = vst.msk [vmem:[%s1] sm:$0x1] %vm133, %v140
  $region13: #{gem_pallas.1} parent=0 // pred_fallthru
    _
  // Predicated region
  $region14: #{gem_pallas.1} parent=0 // pred_check
    _
  $region15: #{gem_pallas.1} parent=0 // pred_check_branch
    %143 = sbr.rel (0) target = $region17
  $region16: #{gem_pallas.1} parent=0 // pred_region
    _
  $region17: #{gem_pallas.1} parent=0 // pred_fallthru
    _
  // Predicated region
  $region18: #{gem_pallas.1} parent=0 // pred_check
    _
  $region19: #{gem_pallas.1} parent=0 // pred_check_branch
    %145 = sbr.rel (0) target = $region21
  $region20: #{gem_pallas.1} parent=0 // pred_region
    _
  $region21: #{gem_pallas.1} parent=0 // pred_fallthru
    _

</llo_original>
